<compile_context>
chip_gen: v7x
topology: tpu7x:2x2x1
jax: 0.10.0
libtpu: 0.0.40
codegen_flags: <defaults>
</compile_context>

<pallas_src>
import math

import jax
import jax.numpy as jnp
from jax import lax
from jax.experimental import pallas as pl
from jax.experimental.pallas import tpu as pltpu

PRIOR_MU = 0.0
PRIOR_SIGMA = 0.2
_LOG_PRIOR_SIGMA = math.log(PRIOR_SIGMA)


def _softplus(x):
    """Numerically stable log1p(exp(x)) (plain log1p(exp(x)) overflows for x >~ 88)."""
    return jnp.maximum(x, 0.0) + jnp.log1p(jnp.exp(-jnp.abs(x)))


def _kl_sum(mu, sigma):
    """sum_elems 0.5*(2*log(sigma/ps) - 1 + (ps/sigma)^2 + ((mu-pm)/sigma)^2)."""
    inv = pl.reciprocal(sigma)          # exact (approx=False): keeps padded elems at ~0 KL
    inv2 = inv * inv
    d = mu - PRIOR_MU
    return 0.5 * jnp.sum(
        2.0 * jnp.log(sigma)
        + (PRIOR_SIGMA * PRIOR_SIGMA) * inv2
        + d * d * inv2
        - (1.0 + 2.0 * _LOG_PRIOR_SIGMA))


def _make_kernel(use_bf16_matmul):
    def kernel(x_ref, wmu_ref, wsig_ref, bmu_ref, bsig_ref, eps_ref,
               out_ref, klp_ref, var_acc, kl_acc):
        i = pl.program_id(0)          # batch tile
        k = pl.program_id(2)          # reduction (in_features) tile
        nk = pl.num_programs(2)

        @pl.when(k == 0)
        def _init():
            out_ref[...] = jnp.zeros_like(out_ref)   # act_mu accumulates in place
            var_acc[...] = jnp.zeros_like(var_acc)
            kl_acc[...] = jnp.zeros_like(kl_acc)

        x = x_ref[...]                 # (tm, tk)
        w_mu = wmu_ref[...]            # (tn, tk)
        w_sigma = wsig_ref[...]        # (tn, tk)  softplus hoisted to the wrapper

        xsq = x * x                    # square in f32 before any bf16 cast
        wsq = w_sigma * w_sigma

        if use_bf16_matmul:
            x_mm, wmu_mm = x.astype(jnp.bfloat16), w_mu.astype(jnp.bfloat16)
            xsq_mm, wsq_mm = xsq.astype(jnp.bfloat16), wsq.astype(jnp.bfloat16)
        else:
            x_mm, wmu_mm, xsq_mm, wsq_mm = x, w_mu, xsq, wsq

        # Contract the last dim of both operands -> torch.nn.Linear layout, no .T
        dims = (((1,), (1,)), ((), ()))
        out_ref[...] += lax.dot_general(x_mm, wmu_mm, dims,
                                        preferred_element_type=jnp.float32)
        var_acc[...] += lax.dot_general(xsq_mm, wsq_mm, dims,
                                        preferred_element_type=jnp.float32)

        # KL depends only on the parameters: compute once per weight tile (i == 0).
        @pl.when(i == 0)
        def _weight_kl():
            kl_acc[...] += _kl_sum(w_mu, w_sigma)

        @pl.when(jnp.logical_and(i == 0, k == 0))
        def _bias_kl():
            kl_acc[...] += _kl_sum(bmu_ref[...], bsig_ref[...])

        @pl.when(k == nk - 1)
        def _finalize():
            b_sigma = bsig_ref[...]                               # (1, tn)
            act_mu = out_ref[...] + bmu_ref[...]
            act_var = var_acc[...] + b_sigma * b_sigma + 1e-16
            act_std = jnp.sqrt(act_var)
            out_ref[...] = (act_mu + _softplus(act_std) * eps_ref[...]
                            ).astype(out_ref.dtype)
            klp_ref[...] = kl_acc[...]

    return kernel


def _round_up(n, m):
    return ((n + m - 1) // m) * m


def _vmem_bytes(tm, tn, tk, itemsize=4):
    """Rough pipeline VMEM footprint (f32): 2x-buffered tiles + scratch + temporaries."""
    x_t, w_t, o_t = tm * tk, tn * tk, tm * tn
    streamed = 2 * (x_t + 2 * w_t + 2 * o_t + 2 * tn)   # x, W_mu, W_sigma, eps, out, biases
    scratch = o_t + 128                                  # var_acc + kl_acc
    temps = x_t + w_t                                    # x*x and W_sigma^2 full-tile temps
    return itemsize * (streamed + scratch + temps)


def _pad2(a, rows, cols, fill):
    a = a.astype(jnp.float32)
    if a.shape == (rows, cols):
        return a                        # already tile-aligned: no extra HBM copy
    return jnp.full((rows, cols), fill, jnp.float32).at[:a.shape[0], :a.shape[1]].set(a)


def bayes_linear(x, W_mu, W_rho, bias_mu, bias_rho, eps, *,
                 tm=None, tn=None, tk=None,
                 use_bf16_matmul=False,
                 vmem_limit_bytes=48 * 1024 * 1024):
    """Forward pass (sample=True). Returns (out (B, OUT), kl scalar)."""
    B, IN = x.shape
    OUT = W_mu.shape[0]
    f32 = jnp.float32

    # ---------------- tile selection (v7x 64 MiB/TC aware) ----------------
    max_n = _round_up(OUT, 128)
    max_k = _round_up(IN, 128)
    full_m = _round_up(B, 8)
    budget = int(0.85 * vmem_limit_bytes)        # headroom for compiler scratch

    tn = min(512, max_n) if tn is None else min(_round_up(tn, 128), max_n)
    tk = min(1024, max_k) if tk is None else min(_round_up(tk, 128), max_k)

    if tm is None:
        # Prefer gm == 1: weight matrices are then streamed from HBM exactly once.
        tm = full_m
        while _vmem_bytes(tm, tn, tk) > budget and tm > 512:
            tm = _round_up(tm // 2, 8)
    else:
        tm = min(_round_up(tm, 8), full_m)

    # Still over budget: shrink K, then N, then M tiles.
    while _vmem_bytes(tm, tn, tk) > budget and tk > 128:
        tk = _round_up(tk // 2, 128)
    while _vmem_bytes(tm, tn, tk) > budget and tn > 128:
        tn = _round_up(tn // 2, 128)
    while _vmem_bytes(tm, tn, tk) > budget and tm > 8:
        tm = _round_up(tm // 2, 8)

    Mp, Np, Kp = _round_up(B, tm), _round_up(OUT, tn), _round_up(IN, tk)
    gm, gn, gk = Mp // tm, Np // tn, Kp // tk

    # v7x has 2 TensorCores: when the batch axis is a single tile, keep the
    # sharded N axis even so both cores get work.
    if gm == 1 and gn % 2 == 1 and tn >= 256 and tn % 256 == 0:
        tn //= 2
        Np = _round_up(OUT, tn)
        gn = Np // tn

    # ------------- operand prep (outside the kernel's hot loop) -----------
    # softplus hoisted out of the kernel: sigma streams instead of rho.
    W_sigma = _softplus(W_rho.astype(f32))
    bias_sigma = _softplus(bias_rho.astype(f32))

    # Pad: mu -> prior_mu, sigma -> prior_sigma so padded weight/bias elements
    # contribute exactly zero to both the matmuls and the KL; x/eps pad with 0.
    xp = _pad2(x, Mp, Kp, 0.0)
    wmup = _pad2(W_mu, Np, Kp, PRIOR_MU)
    wsgp = _pad2(W_sigma, Np, Kp, PRIOR_SIGMA)
    bmup = _pad2(bias_mu.reshape(1, -1), 1, Np, PRIOR_MU)
    bsgp = _pad2(bias_sigma.reshape(1, -1), 1, Np, PRIOR_SIGMA)
    epsp = _pad2(eps, Mp, Np, 0.0)

    out_p, klp = pl.pallas_call(
        _make_kernel(use_bf16_matmul),
        out_shape=(
            jax.ShapeDtypeStruct((Mp, Np), f32),
            jax.ShapeDtypeStruct((gm, gn, 1, 128), f32),   # per-(i,j) KL partials
        ),
        grid_spec=pltpu.PrefetchScalarGridSpec(
            num_scalar_prefetch=0,
            grid=(gm, gn, gk),
            in_specs=[
                pl.BlockSpec((tm, tk), lambda i, j, k: (i, k)),    # x
                pl.BlockSpec((tn, tk), lambda i, j, k: (j, k)),    # W_mu
                pl.BlockSpec((tn, tk), lambda i, j, k: (j, k)),    # W_sigma
                pl.BlockSpec((1, tn), lambda i, j, k: (0, j)),     # bias_mu
                pl.BlockSpec((1, tn), lambda i, j, k: (0, j)),     # bias_sigma
                pl.BlockSpec((tm, tn), lambda i, j, k: (i, j)),    # eps
            ],
            out_specs=(
                pl.BlockSpec((tm, tn), lambda i, j, k: (i, j)),
                pl.BlockSpec((1, 1, 1, 128), lambda i, j, k: (i, j, 0, 0)),
            ),
            scratch_shapes=[
                pltpu.VMEM((tm, tn), f32),          # act_var accumulator
                pltpu.VMEM((1, 1, 1, 128), f32),    # KL partial accumulator
            ],
        ),
        compiler_params=pltpu.CompilerParams(
            dimension_semantics=("parallel", "parallel", "arbitrary"),
            vmem_limit_bytes=vmem_limit_bytes,
        ),
    )(xp, wmup, wsgp, bmup, bsgp, epsp)

    out = out_p[:B, :OUT]
    kl = jnp.sum(klp[0, :, 0, 0])   # weight KL (all j,k tiles) + bias KL
    return out, kl


def _reference(x, W_mu, W_rho, bias_mu, bias_rho, eps):
    """Literal JAX translation of the torch module forward (sample=True)."""
    hi = lax.Precision.HIGHEST
    W_sigma = jnp.log1p(jnp.exp(W_rho))
    bias_sigma = jnp.log1p(jnp.exp(bias_rho))
    act_mu = jnp.dot(x, W_mu.T, precision=hi) + bias_mu
    act_var = 1e-16 + jnp.dot(x ** 2, (W_sigma ** 2).T, precision=hi) + bias_sigma ** 2
    act_std = jnp.sqrt(act_var)
    out = act_mu + jnp.log1p(jnp.exp(act_std)) * eps

    def _kl(mu_p, sig_p):
        return 0.5 * jnp.sum(2.0 * jnp.log(sig_p / PRIOR_SIGMA) - 1.0
                             + (PRIOR_SIGMA / sig_p) ** 2
                             + ((mu_p - PRIOR_MU) / sig_p) ** 2)

    kl = _kl(W_mu, W_sigma) + _kl(bias_mu, bias_sigma)
    return out, kl


if __name__ == "__main__":
    key = jax.random.PRNGKey(0)

    def _make(k, B, IN, OUT):
        kx, kwm, kwr, kbm, kbr, ke = jax.random.split(k, 6)
        # posterior init matches reset_parameters(): N(0, 0.2)
        x = jax.random.normal(kx, (B, IN), jnp.float32)
        W_mu = 0.2 * jax.random.normal(kwm, (OUT, IN), jnp.float32)
        W_rho = 0.2 * jax.random.normal(kwr, (OUT, IN), jnp.float32)
        bias_mu = 0.2 * jax.random.normal(kbm, (OUT,), jnp.float32)
        bias_rho = 0.2 * jax.random.normal(kbr, (OUT,), jnp.float32)
        eps = jax.random.normal(ke, (B, OUT), jnp.float32)
        return x, W_mu, W_rho, bias_mu, bias_rho, eps

    k1, k2 = jax.random.split(key)

    # 1) Small module-like shapes (batch=8, in_features=32, out_features=16):
    #    single-tile grid after lane-dense padding.
    args = _make(k1, 8, 32, 16)
    out, kl = bayes_linear(*args)
    jax.block_until_ready((out, kl))
    ref_out, ref_kl = _reference(*args)
    assert jnp.allclose(out, ref_out, atol=5e-3, rtol=5e-3), "sample mismatch (small)"
    assert jnp.allclose(kl, ref_kl, atol=1e-2, rtol=1e-3), "kl mismatch (small)"

    # 2) Multi-tile grid (explicit small tiles): exercises K accumulation into
    #    the resident output block, tiled KL, and M padding.
    args2 = _make(k2, 40, 384, 256)
    out2, kl2 = bayes_linear(*args2, tm=16, tn=128, tk=128)
    jax.block_until_ready((out2, kl2))
    ref_out2, ref_kl2 = _reference(*args2)
    assert jnp.allclose(out2, ref_out2, atol=1e-2, rtol=1e-2), "sample mismatch (tiled)"
    assert jnp.allclose(kl2, ref_kl2, atol=1e-1, rtol=1e-3), "kl mismatch (tiled)"

    # 3) Auto tile selection (gm == 1, even gn) + bf16 MXU operands (v6e/v7x).
    out3, kl3 = bayes_linear(*args2, use_bf16_matmul=True)
    jax.block_until_ready((out3, kl3))
    assert jnp.allclose(out3, ref_out2, atol=2e-1, rtol=5e-2), "sample mismatch (bf16)"
    assert jnp.allclose(kl3, ref_kl2, atol=1e-1, rtol=1e-3), "kl mismatch (bf16)"

    print("KERNEL_OK")
</pallas_src>

<mosaic_0001>
module attributes {stable_mosaic.version = 11 : i64} {
  func.func @kernel(%arg0: i32, %arg1: i32, %arg2: i32, %arg3: memref<8x128xf32, #tpu.memory_space<vmem>>, %arg4: memref<128x128xf32, #tpu.memory_space<vmem>>, %arg5: memref<128x128xf32, #tpu.memory_space<vmem>>, %arg6: memref<1x128xf32, #tpu.memory_space<vmem>>, %arg7: memref<1x128xf32, #tpu.memory_space<vmem>>, %arg8: memref<8x128xf32, #tpu.memory_space<vmem>>, %arg9: memref<8x128xf32, #tpu.memory_space<vmem>>, %arg10: memref<1x1x1x128xf32, #tpu.memory_space<vmem>>, %arg11: memref<8x128xf32, #tpu.memory_space<vmem>>, %arg12: memref<1x1x1x128xf32, #tpu.memory_space<vmem>>) attributes {dimension_semantics = [#tpu.dimension_semantics<parallel>, #tpu.dimension_semantics<parallel>, #tpu.dimension_semantics<arbitrary>], iteration_bounds = array<i64: 1, 1, 1>, scalar_prefetch = 0 : i64, scratch_operands = 2 : i64, tpu.core_type = #tpu.core_type<tc>, window_params = [{transform_indices = @transform_0, window_bounds = array<i64: 8, 128>}, {transform_indices = @transform_1, window_bounds = array<i64: 128, 128>}, {transform_indices = @transform_2, window_bounds = array<i64: 128, 128>}, {transform_indices = @transform_3, window_bounds = array<i64: 1, 128>}, {transform_indices = @transform_4, window_bounds = array<i64: 1, 128>}, {transform_indices = @transform_5, window_bounds = array<i64: 8, 128>}, {transform_indices = @transform_6, window_bounds = array<i64: 8, 128>}, {transform_indices = @transform_7, window_bounds = array<i64: 1, 1, 1, 128>}]} {
    %c0_i32 = arith.constant 0 : i32
    %0 = arith.cmpi eq, %arg2, %c0_i32 : i32
    %1 = arith.extui %0 : i1 to i32
    %c0_i32_0 = arith.constant 0 : i32
    %2 = arith.cmpi ne, %1, %c0_i32_0 : i32
    scf.if %2 {
      %cst_22 = arith.constant 0.000000e+00 : f32
      %27 = vector.broadcast %cst_22 : f32 to vector<8x128xf32>
      %c0_23 = arith.constant 0 : index
      %c0_24 = arith.constant 0 : index
      %28 = vector.load %arg9[%c0_23, %c0_24] : memref<8x128xf32, #tpu.memory_space<vmem>>, vector<8x128xf32>
      tpu.vector_store %arg9[%c0_23, %c0_24], %27 {strides = array<i32>} : memref<8x128xf32, #tpu.memory_space<vmem>>, vector<8x128xf32>,
      %cst_25 = arith.constant 0.000000e+00 : f32
      %29 = vector.broadcast %cst_25 : f32 to vector<8x128xf32>
      %c0_26 = arith.constant 0 : index
      %c0_27 = arith.constant 0 : index
      %30 = vector.load %arg11[%c0_26, %c0_27] : memref<8x128xf32, #tpu.memory_space<vmem>>, vector<8x128xf32>
      tpu.vector_store %arg11[%c0_26, %c0_27], %29 {strides = array<i32>} : memref<8x128xf32, #tpu.memory_space<vmem>>, vector<8x128xf32>,
      %cst_28 = arith.constant 0.000000e+00 : f32
      %31 = vector.broadcast %cst_28 : f32 to vector<1x1x1x128xf32>
      %c0_29 = arith.constant 0 : index
      %c0_30 = arith.constant 0 : index
      %c0_31 = arith.constant 0 : index
      %c0_32 = arith.constant 0 : index
      %32 = vector.load %arg12[%c0_29, %c0_30, %c0_31, %c0_32] : memref<1x1x1x128xf32, #tpu.memory_space<vmem>>, vector<1x1x1x128xf32>
      tpu.vector_store %arg12[%c0_29, %c0_30, %c0_31, %c0_32], %31 {strides = array<i32>} : memref<1x1x1x128xf32, #tpu.memory_space<vmem>>, vector<1x1x1x128xf32>,
    } else {
    }
    %c0 = arith.constant 0 : index
    %c0_1 = arith.constant 0 : index
    %3 = vector.load %arg3[%c0, %c0_1] : memref<8x128xf32, #tpu.memory_space<vmem>>, vector<8x128xf32>
    %c0_2 = arith.constant 0 : index
    %c0_3 = arith.constant 0 : index
    %4 = vector.load %arg4[%c0_2, %c0_3] : memref<128x128xf32, #tpu.memory_space<vmem>>, vector<128x128xf32>
    %c0_4 = arith.constant 0 : index
    %c0_5 = arith.constant 0 : index
    %5 = vector.load %arg5[%c0_4, %c0_5] : memref<128x128xf32, #tpu.memory_space<vmem>>, vector<128x128xf32>
    %6 = arith.mulf %3, %3 : vector<8x128xf32>
    %7 = arith.mulf %5, %5 : vector<128x128xf32>
    %c0_6 = arith.constant 0 : index
    %c0_7 = arith.constant 0 : index
    %8 = vector.load %arg9[%c0_6, %c0_7] : memref<8x128xf32, #tpu.memory_space<vmem>>, vector<8x128xf32>
    %cst = arith.constant dense<0.000000e+00> : vector<8x128xf32>
    %9 = tpu.matmul %3, %4, %cst {dimension_numbers = #tpu.dot_dimension_numbers<[1], [1], [0], [0], [0, 0, 1, 0], [], []>} : vector<8x128xf32>, vector<128x128xf32>, vector<8x128xf32> -> vector<8x128xf32>
    %10 = arith.addf %8, %9 : vector<8x128xf32>
    %c0_8 = arith.constant 0 : index
    %c0_9 = arith.constant 0 : index
    %11 = vector.load %arg9[%c0_8, %c0_9] : memref<8x128xf32, #tpu.memory_space<vmem>>, vector<8x128xf32>
    tpu.vector_store %arg9[%c0_8, %c0_9], %10 {strides = array<i32>} : memref<8x128xf32, #tpu.memory_space<vmem>>, vector<8x128xf32>,
    %c0_10 = arith.constant 0 : index
    %c0_11 = arith.constant 0 : index
    %12 = vector.load %arg11[%c0_10, %c0_11] : memref<8x128xf32, #tpu.memory_space<vmem>>, vector<8x128xf32>
    %cst_12 = arith.constant dense<0.000000e+00> : vector<8x128xf32>
    %13 = tpu.matmul %6, %7, %cst_12 {dimension_numbers = #tpu.dot_dimension_numbers<[1], [1], [0], [0], [0, 0, 1, 0], [], []>} : vector<8x128xf32>, vector<128x128xf32>, vector<8x128xf32> -> vector<8x128xf32>
    %14 = arith.addf %12, %13 : vector<8x128xf32>
    %c0_13 = arith.constant 0 : index
    %c0_14 = arith.constant 0 : index
    %15 = vector.load %arg11[%c0_13, %c0_14] : memref<8x128xf32, #tpu.memory_space<vmem>>, vector<8x128xf32>
    tpu.vector_store %arg11[%c0_13, %c0_14], %14 {strides = array<i32>} : memref<8x128xf32, #tpu.memory_space<vmem>>, vector<8x128xf32>,
    %c0_i32_15 = arith.constant 0 : i32
    %16 = arith.cmpi eq, %arg0, %c0_i32_15 : i32
    %17 = arith.extui %16 : i1 to i32
    %c0_i32_16 = arith.constant 0 : i32
    %18 = arith.cmpi ne, %17, %c0_i32_16 : i32
    scf.if %18 {
      %c0_22 = arith.constant 0 : index
      %c0_23 = arith.constant 0 : index
      %c0_24 = arith.constant 0 : index
      %c0_25 = arith.constant 0 : index
      %27 = vector.load %arg12[%c0_22, %c0_23, %c0_24, %c0_25] : memref<1x1x1x128xf32, #tpu.memory_space<vmem>>, vector<1x1x1x128xf32>
      %28 = tpu.reciprocal %5 : vector<128x128xf32> -> vector<128x128xf32>
      %29 = arith.mulf %28, %28 : vector<128x128xf32>
      %cst_26 = arith.constant 0.000000e+00 : f32
      %30 = vector.broadcast %cst_26 : f32 to vector<128x128xf32>
      %31 = arith.subf %4, %30 : vector<128x128xf32>
      %32 = math.log %5 : vector<128x128xf32>
      %cst_27 = arith.constant 2.000000e+00 : f32
      %33 = vector.broadcast %cst_27 : f32 to vector<128x128xf32>
      %34 = arith.mulf %33, %32 : vector<128x128xf32>
      %cst_28 = arith.constant 4.000000e-02 : f32
      %35 = vector.broadcast %cst_28 : f32 to vector<128x128xf32>
      %36 = arith.mulf %35, %29 : vector<128x128xf32>
      %37 = arith.addf %34, %36 : vector<128x128xf32>
      %38 = arith.mulf %31, %31 : vector<128x128xf32>
      %39 = arith.mulf %38, %29 : vector<128x128xf32>
      %40 = arith.addf %37, %39 : vector<128x128xf32>
      %cst_29 = arith.constant -2.21887589 : f32
      %41 = vector.broadcast %cst_29 : f32 to vector<128x128xf32>
      %42 = arith.subf %40, %41 : vector<128x128xf32>
      %43 = vector.shape_cast %42 : vector<128x128xf32> to vector<1x128x128xf32>
      %cst_30 = arith.constant dense<0.000000e+00> : vector<1xf32>
      %44 = vector.multi_reduction <add>, %43, %cst_30 [1, 2] : vector<1x128x128xf32> to vector<1xf32>
      %45 = vector.shape_cast %44 : vector<1xf32> to vector<1x1x1xf32>
      %46 = vector.extract %45[0, 0, 0] : f32 from vector<1x1x1xf32>
      %cst_31 = arith.constant 5.000000e-01 : f32
      %47 = arith.mulf %cst_31, %46 : f32
      %48 = vector.broadcast %47 : f32 to vector<1x1x1x128xf32>
      %49 = arith.addf %27, %48 : vector<1x1x1x128xf32>
      %c0_32 = arith.constant 0 : index
      %c0_33 = arith.constant 0 : index
      %c0_34 = arith.constant 0 : index
      %c0_35 = arith.constant 0 : index
      %50 = vector.load %arg12[%c0_32, %c0_33, %c0_34, %c0_35] : memref<1x1x1x128xf32, #tpu.memory_space<vmem>>, vector<1x1x1x128xf32>
      tpu.vector_store %arg12[%c0_32, %c0_33, %c0_34, %c0_35], %49 {strides = array<i32>} : memref<1x1x1x128xf32, #tpu.memory_space<vmem>>, vector<1x1x1x128xf32>,
    } else {
    }
    %c0_i32_17 = arith.constant 0 : i32
    %19 = arith.cmpi eq, %arg0, %c0_i32_17 : i32
    %c0_i32_18 = arith.constant 0 : i32
    %20 = arith.cmpi eq, %arg2, %c0_i32_18 : i32
    %21 = arith.andi %19, %20 : i1
    %22 = arith.extui %21 : i1 to i32
    %c0_i32_19 = arith.constant 0 : i32
    %23 = arith.cmpi ne, %22, %c0_i32_19 : i32
    scf.if %23 {
      %c0_22 = arith.constant 0 : index
      %c0_23 = arith.constant 0 : index
      %c0_24 = arith.constant 0 : index
      %c0_25 = arith.constant 0 : index
      %27 = vector.load %arg12[%c0_22, %c0_23, %c0_24, %c0_25] : memref<1x1x1x128xf32, #tpu.memory_space<vmem>>, vector<1x1x1x128xf32>
      %c0_26 = arith.constant 0 : index
      %c0_27 = arith.constant 0 : index
      %28 = vector.load %arg6[%c0_26, %c0_27] : memref<1x128xf32, #tpu.memory_space<vmem>>, vector<1x128xf32>
      %c0_28 = arith.constant 0 : index
      %c0_29 = arith.constant 0 : index
      %29 = vector.load %arg7[%c0_28, %c0_29] : memref<1x128xf32, #tpu.memory_space<vmem>>, vector<1x128xf32>
      %30 = tpu.reciprocal %29 : vector<1x128xf32> -> vector<1x128xf32>
      %31 = arith.mulf %30, %30 : vector<1x128xf32>
      %cst_30 = arith.constant 0.000000e+00 : f32
      %32 = vector.broadcast %cst_30 : f32 to vector<1x128xf32>
      %33 = arith.subf %28, %32 : vector<1x128xf32>
      %34 = math.log %29 : vector<1x128xf32>
      %cst_31 = arith.constant 2.000000e+00 : f32
      %35 = vector.broadcast %cst_31 : f32 to vector<1x128xf32>
      %36 = arith.mulf %35, %34 : vector<1x128xf32>
      %cst_32 = arith.constant 4.000000e-02 : f32
      %37 = vector.broadcast %cst_32 : f32 to vector<1x128xf32>
      %38 = arith.mulf %37, %31 : vector<1x128xf32>
      %39 = arith.addf %36, %38 : vector<1x128xf32>
      %40 = arith.mulf %33, %33 : vector<1x128xf32>
      %41 = arith.mulf %40, %31 : vector<1x128xf32>
      %42 = arith.addf %39, %41 : vector<1x128xf32>
      %cst_33 = arith.constant -2.21887589 : f32
      %43 = vector.broadcast %cst_33 : f32 to vector<1x128xf32>
      %44 = arith.subf %42, %43 : vector<1x128xf32>
      %45 = vector.shape_cast %44 : vector<1x128xf32> to vector<1x1x128xf32>
      %cst_34 = arith.constant dense<0.000000e+00> : vector<1xf32>
      %46 = vector.multi_reduction <add>, %45, %cst_34 [1, 2] : vector<1x1x128xf32> to vector<1xf32>
      %47 = vector.shape_cast %46 : vector<1xf32> to vector<1x1x1xf32>
      %48 = vector.extract %47[0, 0, 0] : f32 from vector<1x1x1xf32>
      %cst_35 = arith.constant 5.000000e-01 : f32
      %49 = arith.mulf %cst_35, %48 : f32
      %50 = vector.broadcast %49 : f32 to vector<1x1x1x128xf32>
      %51 = arith.addf %27, %50 : vector<1x1x1x128xf32>
      %c0_36 = arith.constant 0 : index
      %c0_37 = arith.constant 0 : index
      %c0_38 = arith.constant 0 : index
      %c0_39 = arith.constant 0 : index
      %52 = vector.load %arg12[%c0_36, %c0_37, %c0_38, %c0_39] : memref<1x1x1x128xf32, #tpu.memory_space<vmem>>, vector<1x1x1x128xf32>
      tpu.vector_store %arg12[%c0_36, %c0_37, %c0_38, %c0_39], %51 {strides = array<i32>} : memref<1x1x1x128xf32, #tpu.memory_space<vmem>>, vector<1x1x1x128xf32>,
    } else {
    }
    %c0_i32_20 = arith.constant 0 : i32
    %24 = arith.cmpi eq, %arg2, %c0_i32_20 : i32
    %25 = arith.extui %24 : i1 to i32
    %c0_i32_21 = arith.constant 0 : i32
    %26 = arith.cmpi ne, %25, %c0_i32_21 : i32
    scf.if %26 {
      %c0_22 = arith.constant 0 : index
      %c0_23 = arith.constant 0 : index
      %27 = vector.load %arg7[%c0_22, %c0_23] : memref<1x128xf32, #tpu.memory_space<vmem>>, vector<1x128xf32>
      %c0_24 = arith.constant 0 : index
      %c0_25 = arith.constant 0 : index
      %28 = vector.load %arg9[%c0_24, %c0_25] : memref<8x128xf32, #tpu.memory_space<vmem>>, vector<8x128xf32>
      %c0_26 = arith.constant 0 : index
      %c0_27 = arith.constant 0 : index
      %29 = vector.load %arg6[%c0_26, %c0_27] : memref<1x128xf32, #tpu.memory_space<vmem>>, vector<1x128xf32>
      %30 = vector.broadcast %29 : vector<1x128xf32> to vector<8x128xf32>
      %31 = arith.addf %28, %30 : vector<8x128xf32>
      %c0_28 = arith.constant 0 : index
      %c0_29 = arith.constant 0 : index
      %32 = vector.load %arg11[%c0_28, %c0_29] : memref<8x128xf32, #tpu.memory_space<vmem>>, vector<8x128xf32>
      %33 = arith.mulf %27, %27 : vector<1x128xf32>
      %34 = vector.broadcast %33 : vector<1x128xf32> to vector<8x128xf32>
      %35 = arith.addf %32, %34 : vector<8x128xf32>
      %cst_30 = arith.constant 1.000000e-16 : f32
      %36 = vector.broadcast %cst_30 : f32 to vector<8x128xf32>
      %37 = arith.addf %35, %36 : vector<8x128xf32>
      %38 = math.sqrt %37 : vector<8x128xf32>
      %cst_31 = arith.constant 0.000000e+00 : f32
      %39 = vector.broadcast %cst_31 : f32 to vector<8x128xf32>
      %40 = arith.maximumf %38, %39 : vector<8x128xf32>
      %41 = math.absf %38 : vector<8x128xf32>
      %cst_32 = arith.constant 0.000000e+00 : f32
      %42 = vector.broadcast %cst_32 : f32 to vector<8x128xf32>
      %43 = arith.subf %42, %41 : vector<8x128xf32>
      %44 = math.exp %43 : vector<8x128xf32>
      %45 = math.log1p %44 : vector<8x128xf32>
      %46 = arith.addf %40, %45 : vector<8x128xf32>
      %c0_33 = arith.constant 0 : index
      %c0_34 = arith.constant 0 : index
      %47 = vector.load %arg8[%c0_33, %c0_34] : memref<8x128xf32, #tpu.memory_space<vmem>>, vector<8x128xf32>
      %48 = arith.mulf %46, %47 : vector<8x128xf32>
      %49 = arith.addf %31, %48 : vector<8x128xf32>
      %c0_35 = arith.constant 0 : index
      %c0_36 = arith.constant 0 : index
      %50 = vector.load %arg9[%c0_35, %c0_36] : memref<8x128xf32, #tpu.memory_space<vmem>>, vector<8x128xf32>
      tpu.vector_store %arg9[%c0_35, %c0_36], %49 {strides = array<i32>} : memref<8x128xf32, #tpu.memory_space<vmem>>, vector<8x128xf32>,
      %c0_37 = arith.constant 0 : index
      %c0_38 = arith.constant 0 : index
      %c0_39 = arith.constant 0 : index
      %c0_40 = arith.constant 0 : index
      %51 = vector.load %arg12[%c0_37, %c0_38, %c0_39, %c0_40] : memref<1x1x1x128xf32, #tpu.memory_space<vmem>>, vector<1x1x1x128xf32>
      %c0_41 = arith.constant 0 : index
      %c0_42 = arith.constant 0 : index
      %c0_43 = arith.constant 0 : index
      %c0_44 = arith.constant 0 : index
      %52 = vector.load %arg10[%c0_41, %c0_42, %c0_43, %c0_44] : memref<1x1x1x128xf32, #tpu.memory_space<vmem>>, vector<1x1x1x128xf32>
      tpu.vector_store %arg10[%c0_41, %c0_42, %c0_43, %c0_44], %51 {strides = array<i32>} : memref<1x1x1x128xf32, #tpu.memory_space<vmem>>, vector<1x1x1x128xf32>,
    } else {
    }
    return
  }
  func.func @transform_0(%arg0: i32, %arg1: i32, %arg2: i32) -> (i32, i32) {
    %c0_i32 = arith.constant 0 : i32
    return %arg0, %arg2 : i32, i32
  }
  func.func @transform_1(%arg0: i32, %arg1: i32, %arg2: i32) -> (i32, i32) {
    %c0_i32 = arith.constant 0 : i32
    return %arg1, %arg2 : i32, i32
  }
  func.func @transform_2(%arg0: i32, %arg1: i32, %arg2: i32) -> (i32, i32) {
    %c0_i32 = arith.constant 0 : i32
    return %arg1, %arg2 : i32, i32
  }
  func.func @transform_3(%arg0: i32, %arg1: i32, %arg2: i32) -> (i32, i32) {
    %c0_i32 = arith.constant 0 : i32
    %c0_i32_0 = arith.constant 0 : i32
    return %c0_i32, %arg1 : i32, i32
  }
  func.func @transform_4(%arg0: i32, %arg1: i32, %arg2: i32) -> (i32, i32) {
    %c0_i32 = arith.constant 0 : i32
    %c0_i32_0 = arith.constant 0 : i32
    return %c0_i32, %arg1 : i32, i32
  }
  func.func @transform_5(%arg0: i32, %arg1: i32, %arg2: i32) -> (i32, i32) {
    %c0_i32 = arith.constant 0 : i32
    return %arg0, %arg1 : i32, i32
  }
  func.func @transform_6(%arg0: i32, %arg1: i32, %arg2: i32) -> (i32, i32) {
    %c0_i32 = arith.constant 0 : i32
    return %arg0, %arg1 : i32, i32
  }
  func.func @transform_7(%arg0: i32, %arg1: i32, %arg2: i32) -> (i32, i32, i32, i32) {
    %c0_i32 = arith.constant 0 : i32
    %c0_i32_0 = arith.constant 0 : i32
    %c0_i32_1 = arith.constant 0 : i32
    return %arg0, %arg1, %c0_i32, %c0_i32_0 : i32, i32, i32, i32
  }
}

</mosaic_0001>

<llo_original>
// kernel: tpu_custom_call.1
$region0: #{tpu_custom_call.1}
  #allocation0 [shape = 'u32[]', space=smem, size = 0x4, offset = 0x4, fixed_abs, tag = 'smem constant byte address 0x4 - core index']
  #allocation1 [shape = 'u32[144,128]{1,0:T(1,128)}', space=vmem, size = 0x12000, scoped, tag = 'internal scratch']
  #allocation2 [shape = 'f32[8,128]{1,0:T(8,128)}', space=vmem, size = 0x1000, scoped, tag = 'scratch operand']
  #allocation3 [shape = 'f32[1,1,1,128]{3,2,1,0:T(1,128)}', space=vmem, size = 0x200, scoped, tag = 'scratch operand']
  %s0 = inlined_call_operand.hbm [shape: f32[8,128], index: 0, kind: input, shape index: {}]
  %s1 = inlined_call_operand.hbm [shape: f32[128,128], index: 1, kind: input, shape index: {}]
  %s2 = inlined_call_operand.hbm [shape: f32[128,128], index: 2, kind: input, shape index: {}]
  %s3 = inlined_call_operand.vmem [shape: f32[1,128], index: 3, kind: input, shape index: {}]
  %s4 = inlined_call_operand.vmem [shape: f32[1,128], index: 4, kind: input, shape index: {}]
  %s5 = inlined_call_operand.vmem [shape: f32[8,128], index: 5, kind: input, shape index: {}]
  %s6 = inlined_call_operand.hbm [shape: f32[8,128], index: 6, kind: output, shape index: {0}]
  %s7 = inlined_call_operand.hbm [shape: f32[1,1,1,128], index: 7, kind: output, shape index: {1}]
  %8 = xla_tuple %s6, %s7
  %s9 = sld [smem:[#allocation0]]
  $region70: #{tpu_custom_call.1} parent=0
    _
  %s11 = ssub.s32 1, %s9
  %s12 = scalar_select 0, %s11, %s9
  $region1: #{tpu_custom_call.1} parent=0
    #allocation4 [shape = 'u8[4096]{0}', space=vmem, size = 0x1000, scoped, tag = 'input window, operand 0, single buffered']
    #allocation5 [shape = 's32[1]{0}', space=sflag, size = 0x4, scoped, tag = 'scoped memory for tpu_custom_call.1']
    #allocation6 [shape = 's32[1]{0}', space=sflag, size = 0x4, scoped, tag = 'scoped memory for tpu_custom_call.1']
    #allocation7 [shape = 'u8[65536]{0}', space=vmem, size = 0x10000, scoped, tag = 'input window, operand 1, single buffered']
    #allocation8 [shape = 's32[1]{0}', space=sflag, size = 0x4, scoped, tag = 'scoped memory for tpu_custom_call.1']
    #allocation9 [shape = 'u8[65536]{0}', space=vmem, size = 0x10000, scoped, tag = 'input window, operand 2, single buffered']
    #allocation10 [shape = 'u8[4096]{0}', space=vmem, size = 0x1000, scoped, tag = 'output window, operand 0, single buffered']
    #allocation11 [shape = 'u8[512]{0}', space=vmem, size = 0x400, scoped, tag = 'output window, operand 1, single buffered']
    #allocation12 [shape = 's32[1]{0}', space=sflag, size = 0x4, scoped, tag = 'scoped memory for tpu_custom_call.1']
    %13 = vsyncpa [#allocation5], 0
    %14 = vsyncpa [#allocation8], 0
    %15 = vsyncpa [#allocation6], 0
    %16 = vsyncpa [#allocation12], 0
    // Predicated region
    $region2: #{tpu_custom_call.1} parent=1 // pred_check
      _
    $region3: #{tpu_custom_call.1} parent=1 // pred_check_branch
      %18 = sbr.rel (0) target = $region5
    $region4: #{tpu_custom_call.1} parent=1 // pred_region
      %s20 = ssub.s32 128, 128
      %21 = vsyncadd [#allocation5], %s20
      %s23 = sshll.u32 [#allocation4], 4
      %s24 = int_to_ptr.vmem [resolvable:$true] %s23
      %26 = dma.hbm_to_vmem [thread:$0]  %s0, 128, %s24, [#allocation5]
    $region5: #{tpu_custom_call.1} parent=1 // pred_fallthru
      _
    // Predicated region
    $region6: #{tpu_custom_call.1} parent=1 // pred_check
      _
    $region7: #{tpu_custom_call.1} parent=1 // pred_check_branch
      %28 = sbr.rel (0) target = $region9
    $region8: #{tpu_custom_call.1} parent=1 // pred_region
      %s30 = ssub.s32 2048, 2048
      %31 = vsyncadd [#allocation8], %s30
      %s32 = sshll.u32 [#allocation7], 4
      %s33 = int_to_ptr.vmem [resolvable:$true] %s32
      %38 = dma.hbm_to_vmem [thread:$0]  %s1, 2048, %s33, [#allocation8], 128, 128, 8
    $region9: #{tpu_custom_call.1} parent=1 // pred_fallthru
      _
    // Predicated region
    $region10: #{tpu_custom_call.1} parent=1 // pred_check
      _
    $region11: #{tpu_custom_call.1} parent=1 // pred_check_branch
      %40 = sbr.rel (0) target = $region13
    $region12: #{tpu_custom_call.1} parent=1 // pred_region
      %s42 = ssub.s32 2048, 2048
      %43 = vsyncadd [#allocation8], %s42
      %s44 = sshll.u32 [#allocation9], 4
      %s45 = int_to_ptr.vmem [resolvable:$true] %s44
      %50 = dma.hbm_to_vmem [thread:$0]  %s2, 2048, %s45, [#allocation8], 128, 128, 8
    $region13: #{tpu_custom_call.1} parent=1 // pred_fallthru
      _
    // Predicated region
    $region14: #{tpu_custom_call.1} parent=1 // pred_check
      _
    $region15: #{tpu_custom_call.1} parent=1 // pred_check_branch
      %52 = sbr.rel (0) target = $region17
    $region16: #{tpu_custom_call.1} parent=1 // pred_region
      _
    $region17: #{tpu_custom_call.1} parent=1 // pred_fallthru
      _
    // Predicated region
    $region18: #{tpu_custom_call.1} parent=1 // pred_check
      _
    $region19: #{tpu_custom_call.1} parent=1 // pred_check_branch
      %54 = sbr.rel (0) target = $region21
    $region20: #{tpu_custom_call.1} parent=1 // pred_region
      _
    $region21: #{tpu_custom_call.1} parent=1 // pred_fallthru
      _
    // Predicated region
    $region22: #{tpu_custom_call.1} parent=1 // pred_check
      _
    $region23: #{tpu_custom_call.1} parent=1 // pred_check_branch
      %56 = sbr.rel (0) target = $region25
    $region24: #{tpu_custom_call.1} parent=1 // pred_region
      _
    $region25: #{tpu_custom_call.1} parent=1 // pred_fallthru
      _
    // Predicated region
    $region26: #{tpu_custom_call.1} parent=1 // pred_check
      _
    $region27: #{tpu_custom_call.1} parent=1 // pred_check_branch
      %58 = sbr.rel (0) target = $region29
    $region28: #{tpu_custom_call.1} parent=1 // pred_region
      %59 = dma.done [#allocation5], 128
    $region29: #{tpu_custom_call.1} parent=1 // pred_fallthru
      _
    // Predicated region
    $region30: #{tpu_custom_call.1} parent=1 // pred_check
      _
    $region31: #{tpu_custom_call.1} parent=1 // pred_check_branch
      %61 = sbr.rel (0) target = $region33
    $region32: #{tpu_custom_call.1} parent=1 // pred_region
      %62 = dma.done [#allocation8], 2048
    $region33: #{tpu_custom_call.1} parent=1 // pred_fallthru
      _
    // Predicated region
    $region34: #{tpu_custom_call.1} parent=1 // pred_check
      _
    $region35: #{tpu_custom_call.1} parent=1 // pred_check_branch
      %64 = sbr.rel (0) target = $region37
    $region36: #{tpu_custom_call.1} parent=1 // pred_region
      %65 = dma.done [#allocation8], 2048
    $region37: #{tpu_custom_call.1} parent=1 // pred_fallthru
      _
    %p66 = scmp.eq.s32.totalorder 0, 0
    // Predicated region
    $region38: #{tpu_custom_call.1} parent=1 // pred_check
      %p67 = pneg %p66
    $region39: #{tpu_custom_call.1} parent=1 // pred_check_branch
      %69 = sbr.rel (%p67) target = $region41
    $region40: #{tpu_custom_call.1} parent=1 // pred_region
      %70 = vst [vmem:[#allocation10] sm:$0xff] 0.0
      %71 = vst [vmem:[#allocation2] sm:$0xff] 0.0
      %72 = vst [vmem:[#allocation3] sm:$0x1] 0.0
    $region41: #{tpu_custom_call.1} parent=1 // pred_fallthru
      _
    %v73 = vld [vmem:[#allocation4] sm:$0xff]
    %v74 = vld [vmem:[#allocation7] sm:$0xff]
    %v75 = vld [vmem:[#allocation7 + $0x8] sm:$0xff]
    %v76 = vld [vmem:[#allocation7 + $0x10] sm:$0xff]
    %v77 = vld [vmem:[#allocation7 + $0x18] sm:$0xff]
    %v78 = vld [vmem:[#allocation7 + $0x20] sm:$0xff]
    %v79 = vld [vmem:[#allocation7 + $0x28] sm:$0xff]
    %v80 = vld [vmem:[#allocation7 + $0x30] sm:$0xff]
    %v81 = vld [vmem:[#allocation7 + $0x38] sm:$0xff]
    %v82 = vld [vmem:[#allocation7 + $0x40] sm:$0xff]
    %v83 = vld [vmem:[#allocation7 + $0x48] sm:$0xff]
    %v84 = vld [vmem:[#allocation7 + $0x50] sm:$0xff]
    %v85 = vld [vmem:[#allocation7 + $0x58] sm:$0xff]
    %v86 = vld [vmem:[#allocation7 + $0x60] sm:$0xff]
    %v87 = vld [vmem:[#allocation7 + $0x68] sm:$0xff]
    %v88 = vld [vmem:[#allocation7 + $0x70] sm:$0xff]
    %v89 = vld [vmem:[#allocation7 + $0x78] sm:$0xff]
    %v90 = vld [vmem:[#allocation9] sm:$0xff]
    %v91 = vld [vmem:[#allocation9 + $0x8] sm:$0xff]
    %v92 = vld [vmem:[#allocation9 + $0x10] sm:$0xff]
    %v93 = vld [vmem:[#allocation9 + $0x18] sm:$0xff]
    %v94 = vld [vmem:[#allocation9 + $0x20] sm:$0xff]
    %v95 = vld [vmem:[#allocation9 + $0x28] sm:$0xff]
    %v96 = vld [vmem:[#allocation9 + $0x30] sm:$0xff]
    %v97 = vld [vmem:[#allocation9 + $0x38] sm:$0xff]
    %v98 = vld [vmem:[#allocation9 + $0x40] sm:$0xff]
    %v99 = vld [vmem:[#allocation9 + $0x48] sm:$0xff]
    %v100 = vld [vmem:[#allocation9 + $0x50] sm:$0xff]
    %v101 = vld [vmem:[#allocation9 + $0x58] sm:$0xff]
    %v102 = vld [vmem:[#allocation9 + $0x60] sm:$0xff]
    %v103 = vld [vmem:[#allocation9 + $0x68] sm:$0xff]
    %v104 = vld [vmem:[#allocation9 + $0x70] sm:$0xff]
    %v105 = vld [vmem:[#allocation9 + $0x78] sm:$0xff]
    %v106 = vmul.f32 %v73, %v73
    %v107 = vmul.f32 %v90, %v90
    %v108 = vmul.f32 %v91, %v91
    %v109 = vmul.f32 %v92, %v92
    %v110 = vmul.f32 %v93, %v93
    %v111 = vmul.f32 %v94, %v94
    %v112 = vmul.f32 %v95, %v95
    %v113 = vmul.f32 %v96, %v96
    %v114 = vmul.f32 %v97, %v97
    %v115 = vmul.f32 %v98, %v98
    %v116 = vmul.f32 %v99, %v99
    %v117 = vmul.f32 %v100, %v100
    %v118 = vmul.f32 %v101, %v101
    %v119 = vmul.f32 %v102, %v102
    %v120 = vmul.f32 %v103, %v103
    %v121 = vmul.f32 %v104, %v104
    %v122 = vmul.f32 %v105, %v105
    %v123 = vld [vmem:[#allocation10] sm:$0xff]
    %124 = vmatprep.subr.mxu0 0.0
    %125 = vmatpush1.xpose.msra.mxu0 %v74
    %126 = vmatprep.subr.mxu0 0.0
    %127 = vmatpush1.xpose.msra.mxu0 %v75
    %128 = vmatprep.subr.mxu0 0.0
    %129 = vmatpush1.xpose.msra.mxu0 %v76
    %130 = vmatprep.subr.mxu0 0.0
    %131 = vmatpush1.xpose.msra.mxu0 %v77
    %132 = vmatprep.subr.mxu0 0.0
    %133 = vmatpush1.xpose.msra.mxu0 %v78
    %134 = vmatprep.subr.mxu0 0.0
    %135 = vmatpush1.xpose.msra.mxu0 %v79
    %136 = vmatprep.subr.mxu0 0.0
    %137 = vmatpush1.xpose.msra.mxu0 %v80
    %138 = vmatprep.subr.mxu0 0.0
    %139 = vmatpush1.xpose.msra.mxu0 %v81
    %140 = vmatprep.subr.mxu0 0.0
    %141 = vmatpush1.xpose.msra.mxu0 %v82
    %142 = vmatprep.subr.mxu0 0.0
    %143 = vmatpush1.xpose.msra.mxu0 %v83
    %144 = vmatprep.subr.mxu0 0.0
    %145 = vmatpush1.xpose.msra.mxu0 %v84
    %146 = vmatprep.subr.mxu0 0.0
    %147 = vmatpush1.xpose.msra.mxu0 %v85
    %148 = vmatprep.subr.mxu0 0.0
    %149 = vmatpush1.xpose.msra.mxu0 %v86
    %150 = vmatprep.subr.mxu0 0.0
    %151 = vmatpush1.xpose.msra.mxu0 %v87
    %152 = vmatprep.subr.mxu0 0.0
    %153 = vmatpush1.xpose.msra.mxu0 %v88
    %154 = vmatprep.subr.mxu0 0.0
    %155 = vmatpush1.xpose.msra.mxu0 %v89
    %156 = vmatprep.subr.mxu0 0.0
    %157 = vmatpush1.xpose.msra.mxu0 0.0
    %158 = vmatprep.subr.mxu0 0.0
    %159 = vmatpush1.xpose.msra.mxu0 0.0
    %160 = vmatprep.subr.mxu0 0.0
    %161 = vmatpush1.xpose.msra.mxu0 0.0
    %162 = vmatprep.subr.mxu0 0.0
    %163 = vmatpush1.xpose.msra.mxu0 0.0
    %164 = vmatprep.subr.mxu0 0.0
    %165 = vmatpush1.xpose.msra.mxu0 0.0
    %166 = vmatprep.subr.mxu0 0.0
    %167 = vmatpush1.xpose.msra.mxu0 0.0
    %168 = vmatprep.subr.mxu0 0.0
    %169 = vmatpush1.xpose.msra.mxu0 0.0
    %170 = vmatprep.subr.mxu0 0.0
    %171 = vmatpush1.xpose.msra.mxu0 0.0
    %172 = vmatprep.subr.mxu0 0.0
    %173 = vmatpush1.xpose.msra.mxu0 0.0
    %174 = vmatprep.subr.mxu0 0.0
    %175 = vmatpush1.xpose.msra.mxu0 0.0
    %176 = vmatprep.subr.mxu0 0.0
    %177 = vmatpush1.xpose.msra.mxu0 0.0
    %178 = vmatprep.subr.mxu0 0.0
    %179 = vmatpush1.xpose.msra.mxu0 0.0
    %180 = vmatprep.subr.mxu0 0.0
    %181 = vmatpush1.xpose.msra.mxu0 0.0
    %182 = vmatprep.subr.mxu0 0.0
    %183 = vmatpush1.xpose.msra.mxu0 0.0
    %184 = vmatprep.subr.mxu0 0.0
    %185 = vmatpush1.xpose.msra.mxu0 0.0
    %186 = vmatprep.subr.mxu0 0.0
    %187 = vmatpush1.xpose.msra.mxu0 0.0
    %188 = vmatprep.mubr.f32.mxu0 0.0
    %189 = vmatmul.mubr.f32.gmra.mrb[0].mxu0 %v73
    %v190 = vpop.f32.mrb[0].mxu0
    %v191 = vadd.f32 0.0, %v190
    %v192 = vpop.f32.mrb[0].mxu0
    %193 = vdwg.mxu0
    %v194 = vadd.f32 %v123, %v191
    %195 = vst [vmem:[#allocation10] sm:$0xff] %v194
    %v196 = vld [vmem:[#allocation2] sm:$0xff]
    %197 = vmatprep.subr.mxu0 0.0
    %198 = vmatpush1.xpose.msra.mxu0 %v107
    %199 = vmatprep.subr.mxu0 0.0
    %200 = vmatpush1.xpose.msra.mxu0 %v108
    %201 = vmatprep.subr.mxu0 0.0
    %202 = vmatpush1.xpose.msra.mxu0 %v109
    %203 = vmatprep.subr.mxu0 0.0
    %204 = vmatpush1.xpose.msra.mxu0 %v110
    %205 = vmatprep.subr.mxu0 0.0
    %206 = vmatpush1.xpose.msra.mxu0 %v111
    %207 = vmatprep.subr.mxu0 0.0
    %208 = vmatpush1.xpose.msra.mxu0 %v112
    %209 = vmatprep.subr.mxu0 0.0
    %210 = vmatpush1.xpose.msra.mxu0 %v113
    %211 = vmatprep.subr.mxu0 0.0
    %212 = vmatpush1.xpose.msra.mxu0 %v114
    %213 = vmatprep.subr.mxu0 0.0
    %214 = vmatpush1.xpose.msra.mxu0 %v115
    %215 = vmatprep.subr.mxu0 0.0
    %216 = vmatpush1.xpose.msra.mxu0 %v116
    %217 = vmatprep.subr.mxu0 0.0
    %218 = vmatpush1.xpose.msra.mxu0 %v117
    %219 = vmatprep.subr.mxu0 0.0
    %220 = vmatpush1.xpose.msra.mxu0 %v118
    %221 = vmatprep.subr.mxu0 0.0
    %222 = vmatpush1.xpose.msra.mxu0 %v119
    %223 = vmatprep.subr.mxu0 0.0
    %224 = vmatpush1.xpose.msra.mxu0 %v120
    %225 = vmatprep.subr.mxu0 0.0
    %226 = vmatpush1.xpose.msra.mxu0 %v121
    %227 = vmatprep.subr.mxu0 0.0
    %228 = vmatpush1.xpose.msra.mxu0 %v122
    %229 = vmatprep.subr.mxu0 0.0
    %230 = vmatpush1.xpose.msra.mxu0 0.0
    %231 = vmatprep.subr.mxu0 0.0
    %232 = vmatpush1.xpose.msra.mxu0 0.0
    %233 = vmatprep.subr.mxu0 0.0
    %234 = vmatpush1.xpose.msra.mxu0 0.0
    %235 = vmatprep.subr.mxu0 0.0
    %236 = vmatpush1.xpose.msra.mxu0 0.0
    %237 = vmatprep.subr.mxu0 0.0
    %238 = vmatpush1.xpose.msra.mxu0 0.0
    %239 = vmatprep.subr.mxu0 0.0
    %240 = vmatpush1.xpose.msra.mxu0 0.0
    %241 = vmatprep.subr.mxu0 0.0
    %242 = vmatpush1.xpose.msra.mxu0 0.0
    %243 = vmatprep.subr.mxu0 0.0
    %244 = vmatpush1.xpose.msra.mxu0 0.0
    %245 = vmatprep.subr.mxu0 0.0
    %246 = vmatpush1.xpose.msra.mxu0 0.0
    %247 = vmatprep.subr.mxu0 0.0
    %248 = vmatpush1.xpose.msra.mxu0 0.0
    %249 = vmatprep.subr.mxu0 0.0
    %250 = vmatpush1.xpose.msra.mxu0 0.0
    %251 = vmatprep.subr.mxu0 0.0
    %252 = vmatpush1.xpose.msra.mxu0 0.0
    %253 = vmatprep.subr.mxu0 0.0
    %254 = vmatpush1.xpose.msra.mxu0 0.0
    %255 = vmatprep.subr.mxu0 0.0
    %256 = vmatpush1.xpose.msra.mxu0 0.0
    %257 = vmatprep.subr.mxu0 0.0
    %258 = vmatpush1.xpose.msra.mxu0 0.0
    %259 = vmatprep.subr.mxu0 0.0
    %260 = vmatpush1.xpose.msra.mxu0 0.0
    %261 = vmatprep.mubr.f32.mxu0 0.0
    %262 = vmatmul.mubr.f32.gmra.mrb[0].mxu0 %v106
    %v263 = vpop.f32.mrb[0].mxu0
    %v264 = vadd.f32 0.0, %v263
    %v265 = vpop.f32.mrb[0].mxu0
    %266 = vdwg.mxu0
    %v267 = vadd.f32 %v196, %v264
    %268 = vst [vmem:[#allocation2] sm:$0xff] %v267
    %p269 = scmp.eq.s32.totalorder 0, 0
    // Predicated region
    $region42: #{tpu_custom_call.1} parent=1 // pred_check
      %p270 = pneg %p269
    $region43: #{tpu_custom_call.1} parent=1 // pred_check_branch
      %272 = sbr.rel (%p270) target = $region45
    $region44: #{tpu_custom_call.1} parent=1 // pred_region
      %v273 = vld [vmem:[#allocation3] sm:$0x1]
      %v274 = vrcp.pop %v90
      %v275 = vrcp.pop %v91
      %v276 = vrcp.pop %v92
      %v277 = vrcp.pop %v93
      %v278 = vrcp.pop %v94
      %v279 = vrcp.pop %v95
      %v280 = vrcp.pop %v96
      %v281 = vrcp.pop %v97
      %v282 = vrcp.pop %v98
      %v283 = vrcp.pop %v99
      %v284 = vrcp.pop %v100
      %v285 = vrcp.pop %v101
      %v286 = vrcp.pop %v102
      %v287 = vrcp.pop %v103
      %v288 = vrcp.pop %v104
      %v289 = vrcp.pop %v105
      %v290 = vmul.f32 %v274, %v274
      %v291 = vmul.f32 %v275, %v275
      %v292 = vmul.f32 %v276, %v276
      %v293 = vmul.f32 %v277, %v277
      %v294 = vmul.f32 %v278, %v278
      %v295 = vmul.f32 %v279, %v279
      %v296 = vmul.f32 %v280, %v280
      %v297 = vmul.f32 %v281, %v281
      %v298 = vmul.f32 %v282, %v282
      %v299 = vmul.f32 %v283, %v283
      %v300 = vmul.f32 %v284, %v284
      %v301 = vmul.f32 %v285, %v285
      %v302 = vmul.f32 %v286, %v286
      %v303 = vmul.f32 %v287, %v287
      %v304 = vmul.f32 %v288, %v288
      %v305 = vmul.f32 %v289, %v289
      %v306 = vlog2.pop %v90
      %v307 = vmul.f32 %v306, 0.6931472
      %v308 = vlog2.pop %v91
      %v309 = vmul.f32 %v308, 0.6931472
      %v310 = vlog2.pop %v92
      %v311 = vmul.f32 %v310, 0.6931472
      %v312 = vlog2.pop %v93
      %v313 = vmul.f32 %v312, 0.6931472
      %v314 = vlog2.pop %v94
      %v315 = vmul.f32 %v314, 0.6931472
      %v316 = vlog2.pop %v95
      %v317 = vmul.f32 %v316, 0.6931472
      %v318 = vlog2.pop %v96
      %v319 = vmul.f32 %v318, 0.6931472
      %v320 = vlog2.pop %v97
      %v321 = vmul.f32 %v320, 0.6931472
      %v322 = vlog2.pop %v98
      %v323 = vmul.f32 %v322, 0.6931472
      %v324 = vlog2.pop %v99
      %v325 = vmul.f32 %v324, 0.6931472
      %v326 = vlog2.pop %v100
      %v327 = vmul.f32 %v326, 0.6931472
      %v328 = vlog2.pop %v101
      %v329 = vmul.f32 %v328, 0.6931472
      %v330 = vlog2.pop %v102
      %v331 = vmul.f32 %v330, 0.6931472
      %v332 = vlog2.pop %v103
      %v333 = vmul.f32 %v332, 0.6931472
      %v334 = vlog2.pop %v104
      %v335 = vmul.f32 %v334, 0.6931472
      %v336 = vlog2.pop %v105
      %v337 = vmul.f32 %v336, 0.6931472
      %v338 = vmul.f32 %v307, 2.0
      %v339 = vmul.f32 %v309, 2.0
      %v340 = vmul.f32 %v311, 2.0
      %v341 = vmul.f32 %v313, 2.0
      %v342 = vmul.f32 %v315, 2.0
      %v343 = vmul.f32 %v317, 2.0
      %v344 = vmul.f32 %v319, 2.0
      %v345 = vmul.f32 %v321, 2.0
      %v346 = vmul.f32 %v323, 2.0
      %v347 = vmul.f32 %v325, 2.0
      %v348 = vmul.f32 %v327, 2.0
      %v349 = vmul.f32 %v329, 2.0
      %v350 = vmul.f32 %v331, 2.0
      %v351 = vmul.f32 %v333, 2.0
      %v352 = vmul.f32 %v335, 2.0
      %v353 = vmul.f32 %v337, 2.0
      %v354 = vmul.f32 %v290, 0.04
      %v355 = vmul.f32 %v291, 0.04
      %v356 = vmul.f32 %v292, 0.04
      %v357 = vmul.f32 %v293, 0.04
      %v358 = vmul.f32 %v294, 0.04
      %v359 = vmul.f32 %v295, 0.04
      %v360 = vmul.f32 %v296, 0.04
      %v361 = vmul.f32 %v297, 0.04
      %v362 = vmul.f32 %v298, 0.04
      %v363 = vmul.f32 %v299, 0.04
      %v364 = vmul.f32 %v300, 0.04
      %v365 = vmul.f32 %v301, 0.04
      %v366 = vmul.f32 %v302, 0.04
      %v367 = vmul.f32 %v303, 0.04
      %v368 = vmul.f32 %v304, 0.04
      %v369 = vmul.f32 %v305, 0.04
      %v370 = vadd.f32 %v338, %v354
      %v371 = vadd.f32 %v339, %v355
      %v372 = vadd.f32 %v340, %v356
      %v373 = vadd.f32 %v341, %v357
      %v374 = vadd.f32 %v342, %v358
      %v375 = vadd.f32 %v343, %v359
      %v376 = vadd.f32 %v344, %v360
      %v377 = vadd.f32 %v345, %v361
      %v378 = vadd.f32 %v346, %v362
      %v379 = vadd.f32 %v347, %v363
      %v380 = vadd.f32 %v348, %v364
      %v381 = vadd.f32 %v349, %v365
      %v382 = vadd.f32 %v350, %v366
      %v383 = vadd.f32 %v351, %v367
      %v384 = vadd.f32 %v352, %v368
      %v385 = vadd.f32 %v353, %v369
      %v386 = vmul.f32 %v74, %v74
      %v387 = vmul.f32 %v75, %v75
      %v388 = vmul.f32 %v76, %v76
      %v389 = vmul.f32 %v77, %v77
      %v390 = vmul.f32 %v78, %v78
      %v391 = vmul.f32 %v79, %v79
      %v392 = vmul.f32 %v80, %v80
      %v393 = vmul.f32 %v81, %v81
      %v394 = vmul.f32 %v82, %v82
      %v395 = vmul.f32 %v83, %v83
      %v396 = vmul.f32 %v84, %v84
      %v397 = vmul.f32 %v85, %v85
      %v398 = vmul.f32 %v86, %v86
      %v399 = vmul.f32 %v87, %v87
      %v400 = vmul.f32 %v88, %v88
      %v401 = vmul.f32 %v89, %v89
      %v402 = vmul.f32 %v386, %v290
      %v403 = vmul.f32 %v387, %v291
      %v404 = vmul.f32 %v388, %v292
      %v405 = vmul.f32 %v389, %v293
      %v406 = vmul.f32 %v390, %v294
      %v407 = vmul.f32 %v391, %v295
      %v408 = vmul.f32 %v392, %v296
      %v409 = vmul.f32 %v393, %v297
      %v410 = vmul.f32 %v394, %v298
      %v411 = vmul.f32 %v395, %v299
      %v412 = vmul.f32 %v396, %v300
      %v413 = vmul.f32 %v397, %v301
      %v414 = vmul.f32 %v398, %v302
      %v415 = vmul.f32 %v399, %v303
      %v416 = vmul.f32 %v400, %v304
      %v417 = vmul.f32 %v401, %v305
      %v418 = vadd.f32 %v370, %v402
      %v419 = vadd.f32 %v371, %v403
      %v420 = vadd.f32 %v372, %v404
      %v421 = vadd.f32 %v373, %v405
      %v422 = vadd.f32 %v374, %v406
      %v423 = vadd.f32 %v375, %v407
      %v424 = vadd.f32 %v376, %v408
      %v425 = vadd.f32 %v377, %v409
      %v426 = vadd.f32 %v378, %v410
      %v427 = vadd.f32 %v379, %v411
      %v428 = vadd.f32 %v380, %v412
      %v429 = vadd.f32 %v381, %v413
      %v430 = vadd.f32 %v382, %v414
      %v431 = vadd.f32 %v383, %v415
      %v432 = vadd.f32 %v384, %v416
      %v433 = vadd.f32 %v385, %v417
      %v434 = vsub.f32 %v418, -2.218876
      %v435 = vsub.f32 %v419, -2.218876
      %v436 = vsub.f32 %v420, -2.218876
      %v437 = vsub.f32 %v421, -2.218876
      %v438 = vsub.f32 %v422, -2.218876
      %v439 = vsub.f32 %v423, -2.218876
      %v440 = vsub.f32 %v424, -2.218876
      %v441 = vsub.f32 %v425, -2.218876
      %v442 = vsub.f32 %v426, -2.218876
      %v443 = vsub.f32 %v427, -2.218876
      %v444 = vsub.f32 %v428, -2.218876
      %v445 = vsub.f32 %v429, -2.218876
      %v446 = vsub.f32 %v430, -2.218876
      %v447 = vsub.f32 %v431, -2.218876
      %v448 = vsub.f32 %v432, -2.218876
      %v449 = vsub.f32 %v433, -2.218876
      %v450 = vadd.f32 %v434, %v435
      %v451 = vadd.f32 %v450, %v436
      %v452 = vadd.f32 %v451, %v437
      %v453 = vadd.f32 %v452, %v438
      %v454 = vadd.f32 %v453, %v439
      %v455 = vadd.f32 %v454, %v440
      %v456 = vadd.f32 %v455, %v441
      %v457 = vadd.f32 %v456, %v442
      %v458 = vadd.f32 %v457, %v443
      %v459 = vadd.f32 %v458, %v444
      %v460 = vadd.f32 %v459, %v445
      %v461 = vadd.f32 %v460, %v446
      %v462 = vadd.f32 %v461, %v447
      %v463 = vadd.f32 %v462, %v448
      %v464 = vadd.f32 %v463, %v449
      %465 = vadd.xlane.f32.xlu0 %v464
      %v466 = vpop.xlane.xlu0 %465
      %v467 = vrot.slane %v466, 4
      %v468 = vadd.f32 %v466, %v467
      %v469 = vrot.slane %v468, 2
      %v470 = vadd.f32 %v468, %v469
      %v471 = vrot.slane %v470, 1
      %v472 = vadd.f32 %v470, %v471
      %s473 = vtos %v472
      %s474 = smul.f32 %s473, 0.5
      %v475 = vstv %s474
      %v476 = vadd.f32 %v273, %v475
      %477 = vst [vmem:[#allocation3] sm:$0x1] %v476
    $region45: #{tpu_custom_call.1} parent=1 // pred_fallthru
      _
    %p478 = pnand %p269, %p66
    %p479 = pneg %p478
    // Predicated region
    $region46: #{tpu_custom_call.1} parent=1 // pred_check
      _
    $region47: #{tpu_custom_call.1} parent=1 // pred_check_branch
      %481 = sbr.rel (%p478) target = $region49
    $region48: #{tpu_custom_call.1} parent=1 // pred_region
      %v482 = vld [vmem:[#allocation3] sm:$0x1]
      %v483 = vld [vmem:[%s3] sm:$0x1]
      %v484 = vld [vmem:[%s4] sm:$0x1]
      %v485 = vrcp.pop %v484
      %v486 = vmul.f32 %v485, %v485
      %v487 = vlog2.pop %v484
      %v488 = vmul.f32 %v487, 0.6931472
      %v489 = vmul.f32 %v488, 2.0
      %v490 = vmul.f32 %v486, 0.04
      %v491 = vadd.f32 %v489, %v490
      %v492 = vmul.f32 %v483, %v483
      %v493 = vmul.f32 %v492, %v486
      %v494 = vadd.f32 %v491, %v493
      %v495 = vsub.f32 %v494, -2.218876
      %vm496 = vcmask 1040384
      %v497 = vsel %vm496, %v495, 0.0
      %498 = vadd.xlane.f32.xlu0 %v497
      %v499 = vpop.xlane.xlu0 %498
      %v500 = vrot.slane %v499, 4
      %v501 = vadd.f32 %v499, %v500
      %v502 = vrot.slane %v501, 2
      %v503 = vadd.f32 %v501, %v502
      %v504 = vrot.slane %v503, 1
      %v505 = vadd.f32 %v503, %v504
      %s506 = vtos %v505
      %s507 = smul.f32 %s506, 0.5
      %v508 = vstv %s507
      %v509 = vadd.f32 %v482, %v508
      %510 = vst [vmem:[#allocation3] sm:$0x1] %v509
    $region49: #{tpu_custom_call.1} parent=1 // pred_fallthru
      _
    // Predicated region
    $region50: #{tpu_custom_call.1} parent=1 // pred_check
      %p511 = pneg %p66
    $region51: #{tpu_custom_call.1} parent=1 // pred_check_branch
      %513 = sbr.rel (%p511) target = $region53
    $region52: #{tpu_custom_call.1} parent=1 // pred_region
      %v514 = vld [vmem:[%s4] sm:$0x1]
      %v515 = vld [vmem:[#allocation10] sm:$0xff]
      %v516 = vld [vmem:[%s3] sm:$0x1]
      %v518 = vlaneseq
      %v519 = vshrl.u32 %v518, 7
      %v520 = vsub.s32 0, %v519
      %v521 = vrot.slane %v516, %v520
      %v523 = vadd.f32 %v515, %v521
      %v524 = vld [vmem:[#allocation2] sm:$0xff]
      %v525 = vmul.f32 %v514, %v514
      %v527 = vlaneseq
      %v528 = vshrl.u32 %v527, 7
      %v529 = vsub.s32 0, %v528
      %v530 = vrot.slane %v525, %v529
      %v532 = vadd.f32 %v524, %v530
      %v533 = vadd.f32 %v532, 1e-16
      %v534 = vrsqrt.pop %v533
      %v535 = vmul.f32 %v533, %v534
      %vm536 = vcmp.eq.f32.partialorder %v533, inf
      %v537 = vsel %vm536, %v533, %v535
      %vm538 = vcmp.eq.f32.partialorder %v533, 0.0
      %v539 = vand.u32 %v533, 2147483648
      %v540 = vsel %vm538, %v539, %v537
      %v541 = vmax.f32 %v540, 0.0
      %v542 = vand.u32 2147483647, %v540
      %v543 = vsub.f32 0.0, %v542
      %v544 = vmul.f32 %v543, 1.442695
      %v545 = vpow.pop %v544
      %v546 = vadd.f32 %v545, 1.0
      %v547 = vlog2.pop %v546
      %v548 = vmul.f32 %v547, 0.6931472
      %v549 = vmul.f32 -0.5, %v545
      %v550 = vadd.f32 %v549, 1.0
      %v551 = vmul.f32 %v550, %v545
      %v552 = vand.u32 2147483647, %v545
      %vm553 = vcmp.lt.f32.partialorder %v552, 0.0004427343
      %v554 = vsel %vm553, %v551, %v548
      %v555 = vadd.f32 %v541, %v554
      %v556 = vld [vmem:[%s5] sm:$0xff]
      %v557 = vmul.f32 %v555, %v556
      %v558 = vadd.f32 %v523, %v557
      %559 = vst [vmem:[#allocation10] sm:$0xff] %v558
      %v560 = vld [vmem:[#allocation3] sm:$0x1]
      %561 = vst [vmem:[#allocation11] sm:$0x1] %v560
    $region53: #{tpu_custom_call.1} parent=1 // pred_fallthru
      _
    // Predicated region
    $region54: #{tpu_custom_call.1} parent=1 // pred_check
      _
    $region55: #{tpu_custom_call.1} parent=1 // pred_check_branch
      %563 = sbr.rel (0) target = $region57
    $region56: #{tpu_custom_call.1} parent=1 // pred_region
      %s565 = ssub.s32 128, 128
      %566 = vsyncadd [#allocation6], %s565
      %s568 = sshll.u32 [#allocation10], 4
      %s569 = int_to_ptr.vmem [resolvable:$true] %s568
      %571 = dma.vmem_to_hbm [thread:$0]  %s569, 128, %s6, [#allocation6]
    $region57: #{tpu_custom_call.1} parent=1 // pred_fallthru
      _
    // Predicated region
    $region58: #{tpu_custom_call.1} parent=1 // pred_check
      _
    $region59: #{tpu_custom_call.1} parent=1 // pred_check_branch
      %573 = sbr.rel (0) target = $region61
    $region60: #{tpu_custom_call.1} parent=1 // pred_region
      %s575 = ssub.s32 16, 16
      %576 = vsyncadd [#allocation12], %s575
      %s578 = sshll.u32 [#allocation11], 4
      %s579 = int_to_ptr.vmem [resolvable:$true] %s578
      %581 = dma.vmem_to_hbm [thread:$0]  %s579, 16, %s7, [#allocation12]
    $region61: #{tpu_custom_call.1} parent=1 // pred_fallthru
      _
    // Predicated region
    $region62: #{tpu_custom_call.1} parent=1 // pred_check
      _
    $region63: #{tpu_custom_call.1} parent=1 // pred_check_branch
      %583 = sbr.rel (0) target = $region65
    $region64: #{tpu_custom_call.1} parent=1 // pred_region
      %584 = dma.done [#allocation6], 128
    $region65: #{tpu_custom_call.1} parent=1 // pred_fallthru
      _
    // Predicated region
    $region66: #{tpu_custom_call.1} parent=1 // pred_check
      _
    $region67: #{tpu_custom_call.1} parent=1 // pred_check_branch
      %586 = sbr.rel (0) target = $region69
    $region68: #{tpu_custom_call.1} parent=1 // pred_region
      %587 = dma.done [#allocation12], 16
    $region69: #{tpu_custom_call.1} parent=1 // pred_fallthru
      _
    %588 = vsyncpa [#allocation5], 1
    %589 = vsyncpa [#allocation8], 1
    %590 = vsyncpa [#allocation6], 1
    %591 = vsyncpa [#allocation12], 1

</llo_original>
